<compile_context>
chip_gen: v7x
topology: tpu7x:2x2x1
jax: 0.10.0
libtpu: 0.0.40
codegen_flags: <defaults>
</compile_context>

<pallas_src>
import functools

import jax
import jax.numpy as jnp
from jax.experimental import pallas as pl
from jax.experimental.pallas import tpu as pltpu


def _round_up(x, m):
    return (x + m - 1) // m * m


def attention_kernel(enc_ref, hb_ref, wet_ref, v_ref, out_ref):
    """One batch tile.

    enc_ref : (S, Bt, De)  encoder outputs, native [seq, batch, feat] layout
    hb_ref  : (Bt, Dd)     hidden @ Wh^T + b   (precomputed in the wrapper)
    wet_ref : (De, Dd)     We^T                (pre-transposed in the wrapper)
    v_ref   : (1, Dd)      v weight row
    out_ref : (Bt, S)      softmax attention, lane-dense in S
    """
    s, bt, de = enc_ref.shape
    dd = wet_ref.shape[1]

    # One MXU matmul over all (seq, batch) rows of this tile.
    enc2 = enc_ref[...].reshape(s * bt, de)                      # (S*Bt, De)
    proj = jnp.dot(enc2, wet_ref[...],
                   preferred_element_type=jnp.float32)           # (S*Bt, Dd)

    # energy = tanh(enc @ We^T + hidden @ Wh^T + b); hidden term broadcast over S.
    energy = jnp.tanh(proj.reshape(s, bt, dd) + hb_ref[...][None, :, :])

    # v-projection: VPU multiply + lane reduction (avoids an N=1 MXU matmul).
    score = jnp.sum(energy * v_ref[...][None, :, :], axis=-1)    # (S, Bt)
    score = score.T                                              # (Bt, S), S on lanes

    # Softmax over the sequence (lane) axis.
    m = jnp.max(score, axis=-1, keepdims=True)
    p = jnp.exp(score - m)
    denom = jnp.sum(p, axis=-1, keepdims=True)
    # Exact reciprocal keeps 1e-5 parity with the XLA reference;
    # pl.reciprocal(denom, approx=True) is a drop-in for production (idle EUP slot).
    out_ref[...] = (p * pl.reciprocal(denom, approx=False)).astype(out_ref.dtype)


@functools.partial(jax.jit, static_argnames=("batch_tile",))
def attention_forward(hidden, encoder_outputs, w_attn, b_attn, w_v, *,
                      batch_tile=64):
    """hidden [B, Dh], encoder_outputs [S, B, De] -> softmax attention [B, S]."""
    S, B, De = encoder_outputs.shape
    Dh = hidden.shape[1]
    Dd = w_attn.shape[0]
    assert w_attn.shape[1] == Dh + De

    # torch.cat((hidden, enc), dim=2) puts hidden first: W_attn = [Wh | We].
    wh = w_attn[:, :Dh]                                           # (Dd, Dh)
    we = w_attn[:, Dh:]                                           # (Dd, De)

    # Hoisted out of the kernel: transposed encoder weight and the full hidden
    # projection (+ bias), computed once by XLA for the whole batch.
    wet = we.T.astype(jnp.float32)                                # (De, Dd)
    hb = (hidden @ wh.T + b_attn[None, :]).astype(jnp.float32)    # (B, Dd)
    v_row = w_v.reshape(1, Dd).astype(jnp.float32)                # (1, Dd)

    # Batch tile: multiple of 8 (sublane) so in-kernel reshape/transpose stay aligned.
    Bt = min(_round_up(B, 8), _round_up(batch_tile, 8))
    Bp = _round_up(B, Bt)
    if Bp != B:
        encoder_outputs = jnp.pad(encoder_outputs, ((0, 0), (0, Bp - B), (0, 0)))
        hb = jnp.pad(hb, ((0, Bp - B), (0, 0)))

    enc = encoder_outputs.astype(jnp.float32)   # native [S, B, De]: no HBM transpose

    out = pl.pallas_call(
        attention_kernel,
        out_shape=jax.ShapeDtypeStruct((Bp, S), jnp.float32),
        grid_spec=pltpu.PrefetchScalarGridSpec(
            num_scalar_prefetch=0,
            grid=(Bp // Bt,),
            in_specs=[
                pl.BlockSpec((S, Bt, De), lambda i: (0, i, 0)),   # native-layout read
                pl.BlockSpec((Bt, Dd), lambda i: (i, 0)),
                pl.BlockSpec((De, Dd), lambda i: (0, 0)),
                pl.BlockSpec((1, Dd), lambda i: (0, 0)),
            ],
            out_specs=pl.BlockSpec((Bt, S), lambda i: (i, 0)),
        ),
        compiler_params=pltpu.CompilerParams(
            dimension_semantics=("parallel",),
            vmem_limit_bytes=32 * 1024 * 1024,
        ),
    )(enc, hb, wet, v_row)

    return out[:B]


def attention_reference(hidden, encoder_outputs, w_attn, b_attn, w_v):
    """Pure-JAX reference mirroring the PyTorch forward exactly."""
    S, B, _ = encoder_outputs.shape
    hidden_rep = jnp.repeat(hidden[:, None, :], S, axis=1)          # [B,S,Dh]
    enc_perm = jnp.transpose(encoder_outputs, (1, 0, 2))            # [B,S,De]
    cat = jnp.concatenate([hidden_rep, enc_perm], axis=2)           # [B,S,Dh+De]
    energy = jnp.tanh(cat @ w_attn.T + b_attn)                      # [B,S,Dd]
    attention = (energy @ w_v.T)[..., 0]                            # [B,S]
    return jax.nn.softmax(attention, axis=1)


if __name__ == "__main__":
    enc_hid_dim = 16
    dec_hid_dim = 32
    B = 2
    S = 8

    key = jax.random.PRNGKey(0)
    k1, k2, k3, k4, k5 = jax.random.split(key, 5)

    # Deterministic parameter init (PyTorch Linear-style uniform bounds).
    bound_attn = 1.0 / jnp.sqrt(2.0 * enc_hid_dim)
    w_attn = jax.random.uniform(k1, (dec_hid_dim, 2 * enc_hid_dim),
                                minval=-bound_attn, maxval=bound_attn,
                                dtype=jnp.float32)
    b_attn = jax.random.uniform(k2, (dec_hid_dim,),
                                minval=-bound_attn, maxval=bound_attn,
                                dtype=jnp.float32)
    bound_v = 1.0 / jnp.sqrt(float(dec_hid_dim))
    w_v = jax.random.uniform(k3, (1, dec_hid_dim),
                             minval=-bound_v, maxval=bound_v, dtype=jnp.float32)

    # Inputs (PyTorch convention): hidden [B, enc_hid], encoder_outputs [S, B, enc_hid].
    hidden = jax.random.normal(k4, (B, enc_hid_dim), dtype=jnp.float32)
    encoder_outputs = jax.random.normal(k5, (S, B, enc_hid_dim), dtype=jnp.float32)

    out = attention_forward(hidden, encoder_outputs, w_attn, b_attn, w_v)
    out = jax.block_until_ready(out)

    ref = attention_reference(hidden, encoder_outputs, w_attn, b_attn, w_v)
    assert out.shape == (B, S)
    assert jnp.allclose(out, ref, rtol=1e-5, atol=1e-5), "mismatch vs reference"

    print("KERNEL_OK")
</pallas_src>

<mosaic_0001>
module attributes {stable_mosaic.version = 11 : i64} {
  func.func @attention_kernel(%arg0: i32, %arg1: memref<8x8x16xf32, #tpu.memory_space<vmem>>, %arg2: memref<8x32xf32, #tpu.memory_space<vmem>>, %arg3: memref<16x32xf32, #tpu.memory_space<vmem>>, %arg4: memref<1x32xf32, #tpu.memory_space<vmem>>, %arg5: memref<8x8xf32, #tpu.memory_space<vmem>>) attributes {dimension_semantics = [#tpu.dimension_semantics<parallel>], iteration_bounds = array<i64: 1>, scalar_prefetch = 0 : i64, scratch_operands = 0 : i64, tpu.core_type = #tpu.core_type<tc>, window_params = [{transform_indices = @transform_0, window_bounds = array<i64: 8, 8, 16>}, {transform_indices = @transform_1, window_bounds = array<i64: 8, 32>}, {pipeline_mode = #tpu.pipeline_mode<synchronous>, transform_indices = @transform_2, window_bounds = array<i64: 16, 32>}, {pipeline_mode = #tpu.pipeline_mode<synchronous>, transform_indices = @transform_3, window_bounds = array<i64: 1, 32>}, {transform_indices = @transform_4, window_bounds = array<i64: 8, 8>}]} {
    %c0 = arith.constant 0 : index
    %c0_0 = arith.constant 0 : index
    %c0_1 = arith.constant 0 : index
    %0 = vector.load %arg1[%c0, %c0_0, %c0_1] : memref<8x8x16xf32, #tpu.memory_space<vmem>>, vector<8x8x16xf32>
    %1 = vector.shape_cast %0 : vector<8x8x16xf32> to vector<64x16xf32>
    %c0_2 = arith.constant 0 : index
    %c0_3 = arith.constant 0 : index
    %2 = vector.load %arg3[%c0_2, %c0_3] : memref<16x32xf32, #tpu.memory_space<vmem>>, vector<16x32xf32>
    %cst = arith.constant dense<0.000000e+00> : vector<64x32xf32>
    %3 = tpu.matmul %1, %2, %cst {dimension_numbers = #tpu.dot_dimension_numbers<[1], [0], [0], [1], [0, 0, 1, 1], [], []>} : vector<64x16xf32>, vector<16x32xf32>, vector<64x32xf32> -> vector<64x32xf32>
    %4 = vector.shape_cast %3 : vector<64x32xf32> to vector<8x8x32xf32>
    %c0_4 = arith.constant 0 : index
    %c0_5 = arith.constant 0 : index
    %5 = vector.load %arg2[%c0_4, %c0_5] : memref<8x32xf32, #tpu.memory_space<vmem>>, vector<8x32xf32>
    %6 = vector.shape_cast %5 : vector<8x32xf32> to vector<1x8x32xf32>
    %7 = vector.broadcast %6 : vector<1x8x32xf32> to vector<8x8x32xf32>
    %8 = arith.addf %4, %7 : vector<8x8x32xf32>
    %9 = math.tanh %8 : vector<8x8x32xf32>
    %c0_6 = arith.constant 0 : index
    %c0_7 = arith.constant 0 : index
    %10 = vector.load %arg4[%c0_6, %c0_7] : memref<1x32xf32, #tpu.memory_space<vmem>>, vector<1x32xf32>
    %11 = vector.shape_cast %10 : vector<1x32xf32> to vector<1x1x32xf32>
    %12 = vector.broadcast %11 : vector<1x1x32xf32> to vector<8x8x32xf32>
    %13 = arith.mulf %9, %12 : vector<8x8x32xf32>
    %cst_8 = arith.constant dense<0.000000e+00> : vector<8x8xf32>
    %14 = vector.multi_reduction <add>, %13, %cst_8 [2] : vector<8x8x32xf32> to vector<8x8xf32>
    %15 = tpu.transpose %14, [1, 0] : vector<8x8xf32> -> vector<8x8xf32>
    %cst_9 = arith.constant dense<0xFF800000> : vector<8xf32>
    %16 = vector.multi_reduction <maximumf>, %15, %cst_9 [1] : vector<8x8xf32> to vector<8xf32>
    %17 = vector.shape_cast %16 : vector<8xf32> to vector<8x1xf32>
    %18 = vector.broadcast %17 : vector<8x1xf32> to vector<8x8xf32>
    %19 = arith.subf %15, %18 : vector<8x8xf32>
    %20 = math.exp %19 : vector<8x8xf32>
    %cst_10 = arith.constant dense<0.000000e+00> : vector<8xf32>
    %21 = vector.multi_reduction <add>, %20, %cst_10 [1] : vector<8x8xf32> to vector<8xf32>
    %22 = vector.shape_cast %21 : vector<8xf32> to vector<8x1xf32>
    %23 = tpu.reciprocal %22 : vector<8x1xf32> -> vector<8x1xf32>
    %24 = vector.broadcast %23 : vector<8x1xf32> to vector<8x8xf32>
    %25 = arith.mulf %20, %24 : vector<8x8xf32>
    %c0_11 = arith.constant 0 : index
    %c0_12 = arith.constant 0 : index
    %26 = vector.load %arg5[%c0_11, %c0_12] : memref<8x8xf32, #tpu.memory_space<vmem>>, vector<8x8xf32>
    tpu.vector_store %arg5[%c0_11, %c0_12], %25 {strides = array<i32>} : memref<8x8xf32, #tpu.memory_space<vmem>>, vector<8x8xf32>,
    return
  }
  func.func @transform_0(%arg0: i32) -> (i32, i32, i32) {
    %c0_i32 = arith.constant 0 : i32
    %c0_i32_0 = arith.constant 0 : i32
    %c0_i32_1 = arith.constant 0 : i32
    return %c0_i32, %arg0, %c0_i32_0 : i32, i32, i32
  }
  func.func @transform_1(%arg0: i32) -> (i32, i32) {
    %c0_i32 = arith.constant 0 : i32
    %c0_i32_0 = arith.constant 0 : i32
    return %arg0, %c0_i32 : i32, i32
  }
  func.func @transform_2(%arg0: i32) -> (i32, i32) {
    %c0_i32 = arith.constant 0 : i32
    %c0_i32_0 = arith.constant 0 : i32
    %c0_i32_1 = arith.constant 0 : i32
    return %c0_i32, %c0_i32_0 : i32, i32
  }
  func.func @transform_3(%arg0: i32) -> (i32, i32) {
    %c0_i32 = arith.constant 0 : i32
    %c0_i32_0 = arith.constant 0 : i32
    %c0_i32_1 = arith.constant 0 : i32
    return %c0_i32, %c0_i32_0 : i32, i32
  }
  func.func @transform_4(%arg0: i32) -> (i32, i32) {
    %c0_i32 = arith.constant 0 : i32
    %c0_i32_0 = arith.constant 0 : i32
    return %arg0, %c0_i32 : i32, i32
  }
}

</mosaic_0001>

<llo_original>
// kernel: attention_forward.1
$region0: #{attention_forward.1}
  #allocation0 [shape = 'u32[]', space=smem, size = 0x4, offset = 0x4, fixed_abs, tag = 'smem constant byte address 0x4 - core index']
  #allocation1 [shape = 'u32[144,128]{1,0:T(1,128)}', space=vmem, size = 0x12000, scoped, tag = 'internal scratch']
  %s0 = inlined_call_operand.vmem [shape: f32[8,8,16], index: 0, kind: input, shape index: {}]
  %s1 = inlined_call_operand.vmem [shape: f32[8,32], index: 1, kind: input, shape index: {}]
  %s2 = inlined_call_operand.vmem [shape: f32[16,32], index: 2, kind: input, shape index: {}]
  %s3 = inlined_call_operand.vmem [shape: f32[1,32], index: 3, kind: input, shape index: {}]
  %s4 = inlined_call_operand.vmem [shape: f32[8,8], index: 4, kind: output, shape index: {}]
  %s5 = sld [smem:[#allocation0]]
  $region26: #{attention_forward.1} parent=0
    _
  %s7 = ssub.s32 1, %s5
  %s8 = scalar_select 0, %s7, %s5
  // Predicated region
  $region2: #{attention_forward.1} parent=0 // pred_check
    _
  $region3: #{attention_forward.1} parent=0 // pred_check_branch
    %10 = sbr.rel (0) target = $region5
  $region4: #{attention_forward.1} parent=0 // pred_region
    _
  $region5: #{attention_forward.1} parent=0 // pred_fallthru
    _
  // Predicated region
  $region6: #{attention_forward.1} parent=0 // pred_check
    _
  $region7: #{attention_forward.1} parent=0 // pred_check_branch
    %12 = sbr.rel (0) target = $region9
  $region8: #{attention_forward.1} parent=0 // pred_region
    _
  $region9: #{attention_forward.1} parent=0 // pred_fallthru
    _
  // Predicated region
  $region10: #{attention_forward.1} parent=0 // pred_check
    _
  $region11: #{attention_forward.1} parent=0 // pred_check_branch
    %14 = sbr.rel (0) target = $region13
  $region12: #{attention_forward.1} parent=0 // pred_region
    _
  $region13: #{attention_forward.1} parent=0 // pred_fallthru
    _
  // Predicated region
  $region14: #{attention_forward.1} parent=0 // pred_check
    _
  $region15: #{attention_forward.1} parent=0 // pred_check_branch
    %16 = sbr.rel (0) target = $region17
  $region16: #{attention_forward.1} parent=0 // pred_region
    _
  $region17: #{attention_forward.1} parent=0 // pred_fallthru
    _
  %v17 = vld [vmem:[%s0] sm:$0xff]
  %v18 = vld [vmem:[%s0 + $0x8] sm:$0xff]
  %v19 = vld [vmem:[%s0 + $0x10] sm:$0xff]
  %v20 = vld [vmem:[%s0 + $0x18] sm:$0xff]
  %v21 = vld [vmem:[%s0 + $0x20] sm:$0xff]
  %v22 = vld [vmem:[%s0 + $0x28] sm:$0xff]
  %v23 = vld [vmem:[%s0 + $0x30] sm:$0xff]
  %v24 = vld [vmem:[%s0 + $0x38] sm:$0xff]
  %v25 = vld [vmem:[%s2] sm:$0xff]
  %v26 = vld [vmem:[%s2 + $0x8] sm:$0xff]
  %vm27 = vcmask 130048
  %v29 = vsel %vm27, %v17, 0
  %v32 = vsel %vm27, %v18, 0
  %v35 = vsel %vm27, %v19, 0
  %v38 = vsel %vm27, %v20, 0
  %v41 = vsel %vm27, %v21, 0
  %v44 = vsel %vm27, %v22, 0
  %v47 = vsel %vm27, %v23, 0
  %v50 = vsel %vm27, %v24, 0
  %52 = vmatprep.subr.mxu0 0.0
  %53 = vmatpush1.msra.mxu0 %v25
  %54 = vmatprep.subr.mxu0 0.0
  %55 = vmatpush1.msra.mxu0 %v26
  %56 = vmatprep.subr.mxu0 0.0
  %57 = vmatpush1.msra.mxu0 0.0
  %58 = vmatprep.subr.mxu0 0.0
  %59 = vmatpush1.msra.mxu0 0.0
  %60 = vmatprep.subr.mxu0 0.0
  %61 = vmatpush1.msra.mxu0 0.0
  %62 = vmatprep.subr.mxu0 0.0
  %63 = vmatpush1.msra.mxu0 0.0
  %64 = vmatprep.subr.mxu0 0.0
  %65 = vmatpush1.msra.mxu0 0.0
  %66 = vmatprep.subr.mxu0 0.0
  %67 = vmatpush1.msra.mxu0 0.0
  %68 = vmatprep.subr.mxu0 0.0
  %69 = vmatpush1.msra.mxu0 0.0
  %70 = vmatprep.subr.mxu0 0.0
  %71 = vmatpush1.msra.mxu0 0.0
  %72 = vmatprep.subr.mxu0 0.0
  %73 = vmatpush1.msra.mxu0 0.0
  %74 = vmatprep.subr.mxu0 0.0
  %75 = vmatpush1.msra.mxu0 0.0
  %76 = vmatprep.subr.mxu0 0.0
  %77 = vmatpush1.msra.mxu0 0.0
  %78 = vmatprep.subr.mxu0 0.0
  %79 = vmatpush1.msra.mxu0 0.0
  %80 = vmatprep.subr.mxu0 0.0
  %81 = vmatpush1.msra.mxu0 0.0
  %82 = vmatprep.subr.mxu0 0.0
  %83 = vmatpush1.msra.mxu0 0.0
  %84 = vmatprep.subr.mxu0 0.0
  %85 = vmatpush1.msra.mxu0 0.0
  %86 = vmatprep.subr.mxu0 0.0
  %87 = vmatpush1.msra.mxu0 0.0
  %88 = vmatprep.subr.mxu0 0.0
  %89 = vmatpush1.msra.mxu0 0.0
  %90 = vmatprep.subr.mxu0 0.0
  %91 = vmatpush1.msra.mxu0 0.0
  %92 = vmatprep.subr.mxu0 0.0
  %93 = vmatpush1.msra.mxu0 0.0
  %94 = vmatprep.subr.mxu0 0.0
  %95 = vmatpush1.msra.mxu0 0.0
  %96 = vmatprep.subr.mxu0 0.0
  %97 = vmatpush1.msra.mxu0 0.0
  %98 = vmatprep.subr.mxu0 0.0
  %99 = vmatpush1.msra.mxu0 0.0
  %100 = vmatprep.subr.mxu0 0.0
  %101 = vmatpush1.msra.mxu0 0.0
  %102 = vmatprep.subr.mxu0 0.0
  %103 = vmatpush1.msra.mxu0 0.0
  %104 = vmatprep.subr.mxu0 0.0
  %105 = vmatpush1.msra.mxu0 0.0
  %106 = vmatprep.subr.mxu0 0.0
  %107 = vmatpush1.msra.mxu0 0.0
  %108 = vmatprep.subr.mxu0 0.0
  %109 = vmatpush1.msra.mxu0 0.0
  %110 = vmatprep.subr.mxu0 0.0
  %111 = vmatpush1.msra.mxu0 0.0
  %112 = vmatprep.subr.mxu0 0.0
  %113 = vmatpush1.msra.mxu0 0.0
  %114 = vmatprep.subr.mxu0 0.0
  %115 = vmatpush1.msra.mxu0 0.0
  %116 = vmatprep.mubr.f32.mxu0 0.0
  %117 = vmatmul.mubr.f32.gmra.mrb[0].mxu0 %v29
  %v118 = vpop.f32.mrb[0].mxu0
  %v119 = vadd.f32 0.0, %v118
  %v120 = vpop.f32.mrb[0].mxu0
  %121 = vmatprep.mubr.f32.mxu0 0.0
  %122 = vmatmul.mubr.f32.gmra.mrb[0].mxu0 %v32
  %v123 = vpop.f32.mrb[0].mxu0
  %v124 = vadd.f32 0.0, %v123
  %v125 = vpop.f32.mrb[0].mxu0
  %126 = vmatprep.mubr.f32.mxu0 0.0
  %127 = vmatmul.mubr.f32.gmra.mrb[0].mxu0 %v35
  %v128 = vpop.f32.mrb[0].mxu0
  %v129 = vadd.f32 0.0, %v128
  %v130 = vpop.f32.mrb[0].mxu0
  %131 = vmatprep.mubr.f32.mxu0 0.0
  %132 = vmatmul.mubr.f32.gmra.mrb[0].mxu0 %v38
  %v133 = vpop.f32.mrb[0].mxu0
  %v134 = vadd.f32 0.0, %v133
  %v135 = vpop.f32.mrb[0].mxu0
  %136 = vmatprep.mubr.f32.mxu0 0.0
  %137 = vmatmul.mubr.f32.gmra.mrb[0].mxu0 %v41
  %v138 = vpop.f32.mrb[0].mxu0
  %v139 = vadd.f32 0.0, %v138
  %v140 = vpop.f32.mrb[0].mxu0
  %141 = vmatprep.mubr.f32.mxu0 0.0
  %142 = vmatmul.mubr.f32.gmra.mrb[0].mxu0 %v44
  %v143 = vpop.f32.mrb[0].mxu0
  %v144 = vadd.f32 0.0, %v143
  %v145 = vpop.f32.mrb[0].mxu0
  %146 = vmatprep.mubr.f32.mxu0 0.0
  %147 = vmatmul.mubr.f32.gmra.mrb[0].mxu0 %v47
  %v148 = vpop.f32.mrb[0].mxu0
  %v149 = vadd.f32 0.0, %v148
  %v150 = vpop.f32.mrb[0].mxu0
  %151 = vmatprep.mubr.f32.mxu0 0.0
  %152 = vmatmul.mubr.f32.gmra.mrb[0].mxu0 %v50
  %v153 = vpop.f32.mrb[0].mxu0
  %v154 = vadd.f32 0.0, %v153
  %v155 = vpop.f32.mrb[0].mxu0
  %156 = vdwg.mxu0
  %v157 = vld [vmem:[%s1] sm:$0xff]
  %v158 = vadd.f32 %v119, %v157
  %v159 = vadd.f32 %v124, %v157
  %v160 = vadd.f32 %v129, %v157
  %v161 = vadd.f32 %v134, %v157
  %v162 = vadd.f32 %v139, %v157
  %v163 = vadd.f32 %v144, %v157
  %v164 = vadd.f32 %v149, %v157
  %v165 = vadd.f32 %v154, %v157
  %v166 = vtanh.pop %v158
  %v167 = vtanh.pop %v159
  %v168 = vtanh.pop %v160
  %v169 = vtanh.pop %v161
  %v170 = vtanh.pop %v162
  %v171 = vtanh.pop %v163
  %v172 = vtanh.pop %v164
  %v173 = vtanh.pop %v165
  %v174 = vld [vmem:[%s3] sm:$0x1]
  %v176 = vlaneseq
  %v177 = vshrl.u32 %v176, 7
  %v178 = vsub.s32 0, %v177
  %v179 = vrot.slane %v174, %v178
  %v181 = vmul.f32 %v166, %v179
  %v182 = vmul.f32 %v167, %v179
  %v183 = vmul.f32 %v168, %v179
  %v184 = vmul.f32 %v169, %v179
  %v185 = vmul.f32 %v170, %v179
  %v186 = vmul.f32 %v171, %v179
  %v187 = vmul.f32 %v172, %v179
  %v188 = vmul.f32 %v173, %v179
  %vm189 = vcmask 261120
  %v190 = vsel %vm189, %v181, 0.0
  %191 = vadd.xlane.f32.xlu0 %v190
  %v192 = vpop.xlane.xlu0 %191
  %v193 = vsel %vm189, %v182, 0.0
  %194 = vadd.xlane.f32.xlu0 %v193
  %v195 = vpop.xlane.xlu0 %194
  %v196 = vsel %vm189, %v183, 0.0
  %197 = vadd.xlane.f32.xlu0 %v196
  %v198 = vpop.xlane.xlu0 %197
  %v199 = vsel %vm189, %v184, 0.0
  %200 = vadd.xlane.f32.xlu0 %v199
  %v201 = vpop.xlane.xlu0 %200
  %v202 = vsel %vm189, %v185, 0.0
  %203 = vadd.xlane.f32.xlu0 %v202
  %v204 = vpop.xlane.xlu0 %203
  %v205 = vsel %vm189, %v186, 0.0
  %206 = vadd.xlane.f32.xlu0 %v205
  %v207 = vpop.xlane.xlu0 %206
  %v208 = vsel %vm189, %v187, 0.0
  %209 = vadd.xlane.f32.xlu0 %v208
  %v210 = vpop.xlane.xlu0 %209
  %v211 = vsel %vm189, %v188, 0.0
  %212 = vadd.xlane.f32.xlu0 %v211
  %v213 = vpop.xlane.xlu0 %212
  %v222 = vlaneseq
  %v223 = vand.u32 %v222, 127
  %v224 = vlaneseq
  %v225 = vshrl.u32 %v224, 7
  %v226 = vsub.s32 %v223, %v225
  %v227 = vrot.slane %v192, %v226
  %v228 = vlaneseq
  %v229 = vshrl.u32 %v228, 7
  %v230 = vsub.s32 %v223, %v229
  %v231 = vrot.slane %v195, %v230
  %v232 = vlaneseq
  %v233 = vshrl.u32 %v232, 7
  %v234 = vsub.s32 %v223, %v233
  %v235 = vrot.slane %v198, %v234
  %v236 = vlaneseq
  %v237 = vshrl.u32 %v236, 7
  %v238 = vsub.s32 %v223, %v237
  %v239 = vrot.slane %v201, %v238
  %v240 = vlaneseq
  %v241 = vshrl.u32 %v240, 7
  %v242 = vsub.s32 %v223, %v241
  %v243 = vrot.slane %v204, %v242
  %v244 = vlaneseq
  %v245 = vshrl.u32 %v244, 7
  %v246 = vsub.s32 %v223, %v245
  %v247 = vrot.slane %v207, %v246
  %v248 = vlaneseq
  %v249 = vshrl.u32 %v248, 7
  %v250 = vsub.s32 %v223, %v249
  %v251 = vrot.slane %v210, %v250
  %v252 = vlaneseq
  %v253 = vshrl.u32 %v252, 7
  %v254 = vsub.s32 %v223, %v253
  %v255 = vrot.slane %v213, %v254
  %vm256 = vcmask 1041409
  %v257 = vsel %vm256, %v231, %v227
  %vm258 = vcmask 1042434
  %v259 = vsel %vm258, %v235, %v257
  %vm260 = vcmask 1043459
  %v261 = vsel %vm260, %v239, %v259
  %vm262 = vcmask 1044484
  %v263 = vsel %vm262, %v243, %v261
  %vm264 = vcmask 1045509
  %v265 = vsel %vm264, %v247, %v263
  %vm266 = vcmask 1046534
  %v267 = vsel %vm266, %v251, %v265
  %vm268 = vcmask 1047559
  %v269 = vsel %vm268, %v255, %v267
  %271 = vxpose.xlu0.b32.start [1/16] %v269, 128
  %272 = vxpose.xlu0.b32.cont [2/16] 0.0, 128
  %273 = vxpose.xlu0.b32.cont [3/16] 0.0, 128
  %274 = vxpose.xlu0.b32.cont [4/16] 0.0, 128
  %275 = vxpose.xlu0.b32.cont [5/16] 0.0, 128
  %276 = vxpose.xlu0.b32.cont [6/16] 0.0, 128
  %277 = vxpose.xlu0.b32.cont [7/16] 0.0, 128
  %278 = vxpose.xlu0.b32.cont [8/16] 0.0, 128
  %279 = vxpose.xlu0.b32.cont [9/16] 0.0, 128
  %280 = vxpose.xlu0.b32.cont [10/16] 0.0, 128
  %281 = vxpose.xlu0.b32.cont [11/16] 0.0, 128
  %282 = vxpose.xlu0.b32.cont [12/16] 0.0, 128
  %283 = vxpose.xlu0.b32.cont [13/16] 0.0, 128
  %284 = vxpose.xlu0.b32.cont [14/16] 0.0, 128
  %285 = vxpose.xlu0.b32.cont [15/16] 0.0, 128
  %286 = vxpose.xlu0.b32.end [16/16] 0.0, 128
  %v287 = vpop.trf.xlu0
  %v288 = vpop.trf.xlu0
  %v289 = vpop.trf.xlu0
  %v290 = vpop.trf.xlu0
  %v291 = vpop.trf.xlu0
  %v292 = vpop.trf.xlu0
  %v293 = vpop.trf.xlu0
  %v294 = vpop.trf.xlu0
  %v295 = vpop.trf.xlu0
  %v296 = vpop.trf.xlu0
  %v297 = vpop.trf.xlu0
  %v298 = vpop.trf.xlu0
  %v299 = vpop.trf.xlu0
  %v300 = vpop.trf.xlu0
  %v301 = vpop.trf.xlu0
  %v302 = vpop.trf.xlu0
  %vm303 = vcmask 64512
  %v304 = vsel %vm303, %v287, -inf
  %305 = vmax.xlane.f32.xlu0 %v304
  %v306 = vpop.xlane.xlu0 %305
  %v307 = vsub.f32 %v287, %v306
  %v308 = vmul.f32 %v307, 1.442695
  %v309 = vpow.pop %v308
  %v310 = vsel %vm303, %v309, 0.0
  %311 = vadd.xlane.f32.xlu0 %v310
  %v312 = vpop.xlane.xlu0 %311
  %v313 = vrcp.pop %v312
  %v314 = vmul.f32 %v309, %v313
  %315 = vst.msk [vmem:[%s4] sm:$0xff] %vm303, %v314
  // Predicated region
  $region18: #{attention_forward.1} parent=0 // pred_check
    _
  $region19: #{attention_forward.1} parent=0 // pred_check_branch
    %317 = sbr.rel (0) target = $region21
  $region20: #{attention_forward.1} parent=0 // pred_region
    _
  $region21: #{attention_forward.1} parent=0 // pred_fallthru
    _
  // Predicated region
  $region22: #{attention_forward.1} parent=0 // pred_check
    _
  $region23: #{attention_forward.1} parent=0 // pred_check_branch
    %319 = sbr.rel (0) target = $region25
  $region24: #{attention_forward.1} parent=0 // pred_region
    _
  $region25: #{attention_forward.1} parent=0 // pred_fallthru
    _

</llo_original>
